<compile_context>
chip_gen: v6e
topology: v6e:2x2x1
jax: 0.10.0
libtpu: 0.0.40
codegen_flags: <defaults>
</compile_context>

<pallas_src>
import jax
import jax.numpy as jnp
from jax.experimental import pallas as pl
from jax.experimental.pallas import tpu as pltpu


def linear_kernel(x_ref, w_ref, b_ref, o_ref):
    # x_ref: (TB, IN) VMEM   w_ref: (OUT=1, IN) VMEM
    # b_ref: (OUT=1,)  SMEM  o_ref: (OUT=1, TB) VMEM  (lane-dense: batch on lanes)
    xf = x_ref[...].astype(jnp.float32)          # f32 math even for bf16 inputs (v5e)
    wf = w_ref[...].astype(jnp.float32)          # (1, IN) broadcasts over the batch
    prod = xf * wf                               # (TB, IN)   VPU broadcast multiply
    y = jnp.sum(prod, axis=-1) + b_ref[0]        # (TB,)      XLU lane reduce + scalar add
    o_ref[...] = y.reshape(o_ref.shape).astype(o_ref.dtype)   # (1, TB) lane-dense store


def linear_pallas(x, weight, bias, *, tb=512):
    """y = x @ weight.T + bias, weight in native nn.Linear (OUT, IN) layout.

    Tiles only the batch axis when B is a multiple of `tb`; otherwise runs a
    single whole-array invocation (block shape == full dims, so the (8,128)
    tiling rule is trivially satisfied).  Weight and bias stay resident across
    grid steps.  TB=512 keeps the per-step overhead (~0.35 us) amortized and a
    double-buffered f32 x-tile well under every generation's scoped-VMEM
    default (v7x's 32 MiB of 64 MiB included) — no vmem_limit_bytes needed.
    """
    B, IN = x.shape
    OUT = weight.shape[0]
    if B % tb != 0:
        tb = B                                   # small / ragged batch: one tile
    nb = B // tb

    out_t = pl.pallas_call(
        linear_kernel,
        out_shape=jax.ShapeDtypeStruct((OUT, B), x.dtype),
        grid_spec=pltpu.PrefetchScalarGridSpec(
            num_scalar_prefetch=0,
            grid=(nb,),
            in_specs=[
                pl.BlockSpec((tb, IN), lambda i: (i, 0)),    # x: batch tile
                pl.BlockSpec((OUT, IN), lambda i: (0, 0)),   # weight: VMEM-resident
                pl.BlockSpec(memory_space=pltpu.MemorySpace.SMEM),  # bias scalar
            ],
            out_specs=pl.BlockSpec((OUT, tb), lambda i: (0, i)),    # lane-dense (1, TB)
        ),
        compiler_params=pltpu.CompilerParams(
            dimension_semantics=("parallel",),   # shards across v7x's 2 TensorCores
        ),
    )(x, weight, bias)

    # Layout plumbing only: present the PyTorch-convention (B, OUT) result.
    return out_t.T


if __name__ == "__main__":
    IN_FEATURES, OUT_FEATURES = 10, 1
    BATCH = 4

    key = jax.random.PRNGKey(0)
    kx, kw, kb = jax.random.split(key, 3)

    # Deterministic inputs/params (shapes match nn.Linear(10, 1)).
    x = jax.random.normal(kx, (BATCH, IN_FEATURES), dtype=jnp.float32)
    weight = jax.random.normal(kw, (OUT_FEATURES, IN_FEATURES), dtype=jnp.float32) * 0.1
    bias = jax.random.normal(kb, (OUT_FEATURES,), dtype=jnp.float32) * 0.1

    out = linear_pallas(x, weight, bias)
    jax.block_until_ready(out)

    # Correctness check against plain JAX reference.
    ref = x @ weight.T + bias
    assert out.shape == (BATCH, OUT_FEATURES)
    assert jnp.allclose(out, ref, atol=1e-5, rtol=1e-5)

    print("KERNEL_OK")
</pallas_src>

<mosaic_0001>
module attributes {stable_mosaic.version = 11 : i64} {
  func.func @linear_kernel(%arg0: i32, %arg1: memref<4x10xf32, #tpu.memory_space<vmem>>, %arg2: memref<1x10xf32, #tpu.memory_space<vmem>>, %arg3: memref<1xf32, #tpu.memory_space<smem>>, %arg4: memref<1x4xf32, #tpu.memory_space<vmem>>) attributes {dimension_semantics = [#tpu.dimension_semantics<parallel>], iteration_bounds = array<i64: 1>, scalar_prefetch = 0 : i64, scratch_operands = 0 : i64, tpu.core_type = #tpu.core_type<tc>, window_params = [{transform_indices = @transform_0, window_bounds = array<i64: 4, 10>}, {pipeline_mode = #tpu.pipeline_mode<synchronous>, transform_indices = @transform_1, window_bounds = array<i64: 1, 10>}, {transform_indices = @transform_2, window_bounds = array<i64: 1>}, {transform_indices = @transform_3, window_bounds = array<i64: 1, 4>}]} {
    %c0 = arith.constant 0 : index
    %c0_0 = arith.constant 0 : index
    %0 = vector.load %arg1[%c0, %c0_0] : memref<4x10xf32, #tpu.memory_space<vmem>>, vector<4x10xf32>
    %c0_1 = arith.constant 0 : index
    %c0_2 = arith.constant 0 : index
    %1 = vector.load %arg2[%c0_1, %c0_2] : memref<1x10xf32, #tpu.memory_space<vmem>>, vector<1x10xf32>
    %2 = vector.broadcast %1 : vector<1x10xf32> to vector<4x10xf32>
    %3 = arith.mulf %0, %2 : vector<4x10xf32>
    %cst = arith.constant dense<0.000000e+00> : vector<4xf32>
    %4 = vector.multi_reduction <add>, %3, %cst [1] : vector<4x10xf32> to vector<4xf32>
    %c0_3 = arith.constant 0 : index
    %5 = memref.load %arg3[%c0_3] : memref<1xf32, #tpu.memory_space<smem>>
    %6 = vector.broadcast %5 : f32 to vector<4xf32>
    %7 = arith.addf %4, %6 : vector<4xf32>
    %8 = vector.shape_cast %7 : vector<4xf32> to vector<1x4xf32>
    %c0_4 = arith.constant 0 : index
    %c0_5 = arith.constant 0 : index
    %9 = vector.load %arg4[%c0_4, %c0_5] : memref<1x4xf32, #tpu.memory_space<vmem>>, vector<1x4xf32>
    tpu.vector_store %arg4[%c0_4, %c0_5], %8 {strides = array<i32>} : memref<1x4xf32, #tpu.memory_space<vmem>>, vector<1x4xf32>,
    return
  }
  func.func @transform_0(%arg0: i32) -> (i32, i32) {
    %c0_i32 = arith.constant 0 : i32
    %c0_i32_0 = arith.constant 0 : i32
    return %arg0, %c0_i32 : i32, i32
  }
  func.func @transform_1(%arg0: i32) -> (i32, i32) {
    %c0_i32 = arith.constant 0 : i32
    %c0_i32_0 = arith.constant 0 : i32
    %c0_i32_1 = arith.constant 0 : i32
    return %c0_i32, %c0_i32_0 : i32, i32
  }
  func.func @transform_2(%arg0: i32) -> i32 {
    %c0_i32 = arith.constant 0 : i32
    %c0_i32_0 = arith.constant 0 : i32
    return %c0_i32 : i32
  }
  func.func @transform_3(%arg0: i32) -> (i32, i32) {
    %c0_i32 = arith.constant 0 : i32
    %c0_i32_0 = arith.constant 0 : i32
    return %c0_i32, %arg0 : i32, i32
  }
}

</mosaic_0001>

<llo_original>
// kernel: tpu_custom_call.1
$region0: #{tpu_custom_call.1}
  #allocation0 [shape = 'u32[]', space=smem, size = 0x4, offset = 0x4, fixed_abs, tag = 'smem constant byte address 0x4 - core index']
  #allocation1 [shape = 'u32[144,128]{1,0:T(1,128)}', space=vmem, size = 0x12000, scoped, tag = 'internal scratch']
  #allocation2 [shape = 'f32[1]{0:T(128)S(6)}', space=smem, size = 0x200, scoped, tag = 'scoped memory for tpu_custom_call.1']
  %s0 = inlined_call_operand.hbm [shape: f32[4,10], index: 0, kind: input, shape index: {}]
  %s1 = inlined_call_operand.vmem [shape: f32[1,10], index: 1, kind: input, shape index: {}]
  %s2 = inlined_call_operand.<no memory space> [shape: f32[1], index: 2, kind: input, shape index: {}]
  %s3 = inlined_call_operand.hbm [shape: f32[1,4], index: 3, kind: output, shape index: {}]
  %s4 = sld [smem:[#allocation0]]
  $region26: #{tpu_custom_call.1} parent=0
    _
  %s6 = ssub.s32 1, %s4
  %s7 = scalar_select 0, %s6, %s4
  %8 = sst [smem:[#allocation2]] %s2
  $region1: #{tpu_custom_call.1} parent=0
    #allocation3 [shape = 'u8[2048]{0}', space=vmem, size = 0x800, scoped, tag = 'input window, operand 0, single buffered']
    #allocation4 [shape = 's32[1]{0}', space=sflag, size = 0x4, scoped, tag = 'scoped memory for tpu_custom_call.1']
    #allocation5 [shape = 's32[1]{0}', space=sflag, size = 0x4, scoped, tag = 'scoped memory for tpu_custom_call.1']
    #allocation6 [shape = 'u8[512]{0}', space=vmem, size = 0x400, scoped, tag = 'output window, operand 0, single buffered']
    %9 = vsyncpa [#allocation4], 0
    %10 = vsyncpa [#allocation5], 0
    // Predicated region
    $region2: #{tpu_custom_call.1} parent=1 // pred_check
      _
    $region3: #{tpu_custom_call.1} parent=1 // pred_check_branch
      %12 = sbr.rel (0) target = $region5
    $region4: #{tpu_custom_call.1} parent=1 // pred_region
      %s14 = ssub.s32 64, 64
      %15 = vsyncadd [#allocation4], %s14
      %s17 = sshll.u32 [#allocation3], 4
      %s18 = int_to_ptr.vmem [resolvable:$true] %s17
      %20 = dma.hbm_to_vmem [thread:$0]  %s0, 64, %s18, [#allocation4]
    $region5: #{tpu_custom_call.1} parent=1 // pred_fallthru
      _
    // Predicated region
    $region6: #{tpu_custom_call.1} parent=1 // pred_check
      _
    $region7: #{tpu_custom_call.1} parent=1 // pred_check_branch
      %22 = sbr.rel (0) target = $region9
    $region8: #{tpu_custom_call.1} parent=1 // pred_region
      _
    $region9: #{tpu_custom_call.1} parent=1 // pred_fallthru
      _
    // Predicated region
    $region10: #{tpu_custom_call.1} parent=1 // pred_check
      _
    $region11: #{tpu_custom_call.1} parent=1 // pred_check_branch
      %24 = sbr.rel (0) target = $region13
    $region12: #{tpu_custom_call.1} parent=1 // pred_region
      _
    $region13: #{tpu_custom_call.1} parent=1 // pred_fallthru
      _
    // Predicated region
    $region14: #{tpu_custom_call.1} parent=1 // pred_check
      _
    $region15: #{tpu_custom_call.1} parent=1 // pred_check_branch
      %26 = sbr.rel (0) target = $region17
    $region16: #{tpu_custom_call.1} parent=1 // pred_region
      %27 = dma.done [#allocation4], 64
    $region17: #{tpu_custom_call.1} parent=1 // pred_fallthru
      _
    %v28 = vld [vmem:[#allocation3] sm:$0xf]
    %v29 = vld [vmem:[%s1] sm:$0x1]
    %v31 = vlaneseq
    %v32 = vshrl.u32 %v31, 7
    %v33 = vsub.s32 0, %v32
    %v34 = vrot.slane %v29, %v33
    %v36 = vmul.f32 %v28, %v34
    %vm37 = vcmask 76800
    %v38 = vsel %vm37, %v36, 0.0
    %39 = vadd.xlane.f32.xlu0 %v38
    %v40 = vpop.xlane.xlu0 %39
    %s41 = sld [smem:[#allocation2]]
    %v42 = vstv %s41
    %v43 = vadd.f32 %v40, %v42
    %v45 = vlaneseq
    %v46 = vand.u32 %v45, 127
    %v47 = vlaneseq
    %v48 = vshrl.u32 %v47, 7
    %v49 = vsub.s32 %v46, %v48
    %v50 = vrot.slane %v43, %v49
    %vm52 = vcmask 24576
    %53 = vst.msk [vmem:[#allocation6] sm:$0x1] %vm52, %v50
    // Predicated region
    $region18: #{tpu_custom_call.1} parent=1 // pred_check
      _
    $region19: #{tpu_custom_call.1} parent=1 // pred_check_branch
      %55 = sbr.rel (0) target = $region21
    $region20: #{tpu_custom_call.1} parent=1 // pred_region
      %s57 = ssub.s32 16, 16
      %58 = vsyncadd [#allocation5], %s57
      %s60 = sshll.u32 [#allocation6], 4
      %s61 = int_to_ptr.vmem [resolvable:$true] %s60
      %63 = dma.vmem_to_hbm [thread:$0]  %s61, 16, %s3, [#allocation5]
    $region21: #{tpu_custom_call.1} parent=1 // pred_fallthru
      _
    // Predicated region
    $region22: #{tpu_custom_call.1} parent=1 // pred_check
      _
    $region23: #{tpu_custom_call.1} parent=1 // pred_check_branch
      %65 = sbr.rel (0) target = $region25
    $region24: #{tpu_custom_call.1} parent=1 // pred_region
      %66 = dma.done [#allocation5], 16
    $region25: #{tpu_custom_call.1} parent=1 // pred_fallthru
      _
    %67 = vsyncpa [#allocation4], 1
    %68 = vsyncpa [#allocation5], 1

</llo_original>
